<compile_context>
chip_gen: v7x
topology: tpu7x:2x2x1
jax: 0.10.0
libtpu: 0.0.40
codegen_flags: <defaults>
</compile_context>

<pallas_src>
import jax
import jax.numpy as jnp
from jax.experimental import pallas as pl
from jax.experimental.pallas import tpu as pltpu

IN_FEATURES = 28 * 28      # 784
OUT_FEATURES = 10
N_PAD = 128                # lane-dense padded output width


def _round_up(x, m):
    return (x + m - 1) // m * m


def _linear_kernel(x_ref, wt_ref, b_ref, o_ref):
    # x_ref:  (TB, 784)  bf16 in VMEM (streamed tile of the batch)
    # wt_ref: (784, 128) bf16 in VMEM (resident, zero-padded transposed weight)
    # b_ref:  (1, 128)   f32  in VMEM (resident, zero-padded bias)
    # o_ref:  (TB, 128)  f32  (lane-dense output tile)
    acc = jnp.dot(x_ref[...], wt_ref[...], preferred_element_type=jnp.float32)
    o_ref[...] = (acc + b_ref[...]).astype(o_ref.dtype)


def simple_perceptron_forward(images, weight, bias, *, tb=1024):
    """Forward pass of SimplePerceptronModel.

    images: (B, 1, 28, 28) (NCHW) or anything reshapeable to (B, 784).
    weight: (10, 784) (PyTorch nn.Linear convention), bias: (10,).
    Returns (B, 10) logits in the input dtype.
    """
    out_dtype = images.dtype
    x = images.reshape(-1, IN_FEATURES)          # same as torch .view(-1, 784)
    B = x.shape[0]

    # Batch tile: multiple of 16 (bf16 sublanes); pad B up to a multiple of TB.
    TB = min(tb, _round_up(B, 16))
    Bp = _round_up(B, TB)
    if Bp != B:
        x = jnp.pad(x, ((0, Bp - B), (0, 0)))

    # bf16 streamed activations / resident weight; f32 bias (added post-MXU).
    x = x.astype(jnp.bfloat16)
    wt = jnp.pad(weight.T, ((0, 0), (0, N_PAD - OUT_FEATURES))).astype(jnp.bfloat16)
    b = jnp.pad(bias, (0, N_PAD - OUT_FEATURES)).reshape(1, N_PAD).astype(jnp.float32)

    grid = (Bp // TB,)
    cost = pl.CostEstimate(
        flops=2 * Bp * IN_FEATURES * N_PAD,
        transcendentals=0,
        bytes_accessed=(Bp * IN_FEATURES * 2          # x stream (bf16)
                        + IN_FEATURES * N_PAD * 2     # weight (bf16)
                        + Bp * N_PAD * 4),            # output (f32)
    )

    out = pl.pallas_call(
        _linear_kernel,
        out_shape=jax.ShapeDtypeStruct((Bp, N_PAD), jnp.float32),
        grid=grid,
        in_specs=[
            pl.BlockSpec((TB, IN_FEATURES), lambda i: (i, 0)),   # streamed x tile
            pl.BlockSpec((IN_FEATURES, N_PAD), lambda i: (0, 0)),  # resident W^T
            pl.BlockSpec((1, N_PAD), lambda i: (0, 0)),            # resident bias
        ],
        out_specs=pl.BlockSpec((TB, N_PAD), lambda i: (i, 0)),
        compiler_params=pltpu.CompilerParams(
            dimension_semantics=("parallel",),
            vmem_limit_bytes=32 * 1024 * 1024,
        ),
        cost_estimate=cost,
    )(x, wt, b)

    # Strip batch padding and the lane padding of the output dimension.
    return out[:B, :OUT_FEATURES].astype(out_dtype)


def init_params(key):
    # Deterministic init mimicking nn.Linear default: U(-1/sqrt(in), 1/sqrt(in))
    kw, kb = jax.random.split(key)
    bound = 1.0 / (IN_FEATURES ** 0.5)
    weight = jax.random.uniform(kw, (OUT_FEATURES, IN_FEATURES), jnp.float32, -bound, bound)
    bias = jax.random.uniform(kb, (OUT_FEATURES,), jnp.float32, -bound, bound)
    return weight, bias


if __name__ == "__main__":
    key = jax.random.PRNGKey(0)
    k_img, k_par = jax.random.split(key)

    # Small MNIST-like batch: (B=8, C=1, H=28, W=28), NCHW like PyTorch.
    images = jax.random.normal(k_img, (8, 1, 28, 28), jnp.float32)
    weight, bias = init_params(k_par)

    out = simple_perceptron_forward(images, weight, bias)
    out = jax.block_until_ready(out)
    assert out.shape == (8, OUT_FEATURES)

    # Reference 1: full-f32 PyTorch-equivalent (kernel streams bf16, so use a
    # tolerance appropriate for bf16 inputs over a 784-deep dot).
    x_f32 = images.reshape(-1, IN_FEATURES)
    ref_f32 = x_f32 @ weight.T + bias
    assert jnp.allclose(out, ref_f32, atol=5e-2, rtol=5e-2)

    # Reference 2: same bf16 cast as the kernel, f32 accumulation -> tight match.
    ref_bf16 = jnp.dot(
        x_f32.astype(jnp.bfloat16),
        weight.T.astype(jnp.bfloat16),
        preferred_element_type=jnp.float32,
    ) + bias
    assert jnp.allclose(out, ref_bf16, atol=1e-3, rtol=1e-3)

    print("KERNEL_OK")
</pallas_src>

<mosaic_0001>
module attributes {stable_mosaic.version = 11 : i64} {
  func.func @_linear_kernel(%arg0: i32, %arg1: memref<16x784xbf16, #tpu.memory_space<vmem>>, %arg2: memref<784x128xbf16, #tpu.memory_space<vmem>>, %arg3: memref<1x128xf32, #tpu.memory_space<vmem>>, %arg4: memref<16x128xf32, #tpu.memory_space<vmem>>) attributes {dimension_semantics = [#tpu.dimension_semantics<parallel>], iteration_bounds = array<i64: 1>, scalar_prefetch = 0 : i64, scratch_operands = 0 : i64, tpu.core_type = #tpu.core_type<tc>, window_params = [{transform_indices = @transform_0, window_bounds = array<i64: 16, 784>}, {pipeline_mode = #tpu.pipeline_mode<synchronous>, transform_indices = @transform_1, window_bounds = array<i64: 784, 128>}, {pipeline_mode = #tpu.pipeline_mode<synchronous>, transform_indices = @transform_2, window_bounds = array<i64: 1, 128>}, {transform_indices = @transform_3, window_bounds = array<i64: 16, 128>}]} {
    %c0 = arith.constant 0 : index
    %c0_0 = arith.constant 0 : index
    %0 = vector.load %arg1[%c0, %c0_0] : memref<16x784xbf16, #tpu.memory_space<vmem>>, vector<16x784xbf16>
    %c0_1 = arith.constant 0 : index
    %c0_2 = arith.constant 0 : index
    %1 = vector.load %arg2[%c0_1, %c0_2] : memref<784x128xbf16, #tpu.memory_space<vmem>>, vector<784x128xbf16>
    %cst = arith.constant dense<0.000000e+00> : vector<16x128xf32>
    %2 = tpu.matmul %0, %1, %cst {dimension_numbers = #tpu.dot_dimension_numbers<[1], [0], [0], [1], [0, 0, 1, 1], [], []>} : vector<16x784xbf16>, vector<784x128xbf16>, vector<16x128xf32> -> vector<16x128xf32>
    %c0_3 = arith.constant 0 : index
    %c0_4 = arith.constant 0 : index
    %3 = vector.load %arg3[%c0_3, %c0_4] : memref<1x128xf32, #tpu.memory_space<vmem>>, vector<1x128xf32>
    %4 = vector.broadcast %3 : vector<1x128xf32> to vector<16x128xf32>
    %5 = arith.addf %2, %4 : vector<16x128xf32>
    %c0_5 = arith.constant 0 : index
    %c0_6 = arith.constant 0 : index
    %6 = vector.load %arg4[%c0_5, %c0_6] : memref<16x128xf32, #tpu.memory_space<vmem>>, vector<16x128xf32>
    tpu.vector_store %arg4[%c0_5, %c0_6], %5 {strides = array<i32>} : memref<16x128xf32, #tpu.memory_space<vmem>>, vector<16x128xf32>,
    return
  }
  func.func @transform_0(%arg0: i32) -> (i32, i32) {
    %c0_i32 = arith.constant 0 : i32
    %c0_i32_0 = arith.constant 0 : i32
    return %arg0, %c0_i32 : i32, i32
  }
  func.func @transform_1(%arg0: i32) -> (i32, i32) {
    %c0_i32 = arith.constant 0 : i32
    %c0_i32_0 = arith.constant 0 : i32
    %c0_i32_1 = arith.constant 0 : i32
    return %c0_i32, %c0_i32_0 : i32, i32
  }
  func.func @transform_2(%arg0: i32) -> (i32, i32) {
    %c0_i32 = arith.constant 0 : i32
    %c0_i32_0 = arith.constant 0 : i32
    %c0_i32_1 = arith.constant 0 : i32
    return %c0_i32, %c0_i32_0 : i32, i32
  }
  func.func @transform_3(%arg0: i32) -> (i32, i32) {
    %c0_i32 = arith.constant 0 : i32
    %c0_i32_0 = arith.constant 0 : i32
    return %arg0, %c0_i32 : i32, i32
  }
}

</mosaic_0001>

<llo_original>
// kernel: tpu_custom_call.1
$region0: #{tpu_custom_call.1}
  #allocation0 [shape = 'u32[]', space=smem, size = 0x4, offset = 0x4, fixed_abs, tag = 'smem constant byte address 0x4 - core index']
  #allocation1 [shape = 'u32[144,128]{1,0:T(1,128)}', space=vmem, size = 0x12000, scoped, tag = 'internal scratch']
  %s0 = inlined_call_operand.hbm [shape: bf16[16,784], index: 0, kind: input, shape index: {}]
  %s1 = inlined_call_operand.hbm [shape: bf16[784,128], index: 1, kind: input, shape index: {}]
  %s2 = inlined_call_operand.vmem [shape: f32[1,128], index: 2, kind: input, shape index: {}]
  %s3 = inlined_call_operand.hbm [shape: f32[16,128], index: 3, kind: output, shape index: {}]
  %s4 = sld [smem:[#allocation0]]
  $region30: #{tpu_custom_call.1} parent=0
    _
  %s6 = ssub.s32 1, %s4
  %s7 = scalar_select 0, %s6, %s4
  $region1: #{tpu_custom_call.1} parent=0
    #allocation2 [shape = 'u8[28672]{0}', space=vmem, size = 0x7000, scoped, tag = 'input window, operand 0, single buffered']
    #allocation3 [shape = 's32[1]{0}', space=sflag, size = 0x4, scoped, tag = 'scoped memory for tpu_custom_call.1']
    #allocation4 [shape = 's32[1]{0}', space=sflag, size = 0x4, scoped, tag = 'scoped memory for tpu_custom_call.1']
    #allocation5 [shape = 'u8[200704]{0}', space=vmem, size = 0x31000, scoped, tag = 'input window, operand 1, single buffered']
    #allocation6 [shape = 's32[1]{0}', space=sflag, size = 0x4, scoped, tag = 'scoped memory for tpu_custom_call.1']
    #allocation7 [shape = 'u8[8192]{0}', space=vmem, size = 0x2000, scoped, tag = 'output window, operand 0, single buffered']
    %8 = vsyncpa [#allocation3], 0
    %9 = vsyncpa [#allocation6], 0
    %10 = vsyncpa [#allocation4], 0
    // Predicated region
    $region2: #{tpu_custom_call.1} parent=1 // pred_check
      _
    $region3: #{tpu_custom_call.1} parent=1 // pred_check_branch
      %12 = sbr.rel (0) target = $region5
    $region4: #{tpu_custom_call.1} parent=1 // pred_region
      %s14 = ssub.s32 896, 896
      %15 = vsyncadd [#allocation3], %s14
      %s16 = sshll.u32 [#allocation2], 4
      %s17 = int_to_ptr.vmem [resolvable:$true] %s16
      %22 = dma.hbm_to_vmem [thread:$0]  %s0, 896, %s17, [#allocation3], 448, 448, 28
    $region5: #{tpu_custom_call.1} parent=1 // pred_fallthru
      _
    // Predicated region
    $region6: #{tpu_custom_call.1} parent=1 // pred_check
      _
    $region7: #{tpu_custom_call.1} parent=1 // pred_check_branch
      %24 = sbr.rel (0) target = $region9
    $region8: #{tpu_custom_call.1} parent=1 // pred_region
      %s26 = ssub.s32 6272, 6272
      %27 = vsyncadd [#allocation6], %s26
      %s28 = sshll.u32 [#allocation5], 4
      %s29 = int_to_ptr.vmem [resolvable:$true] %s28
      %34 = dma.hbm_to_vmem [thread:$0]  %s1, 6272, %s29, [#allocation6], 64, 64, 4
    $region9: #{tpu_custom_call.1} parent=1 // pred_fallthru
      _
    // Predicated region
    $region10: #{tpu_custom_call.1} parent=1 // pred_check
      _
    $region11: #{tpu_custom_call.1} parent=1 // pred_check_branch
      %36 = sbr.rel (0) target = $region13
    $region12: #{tpu_custom_call.1} parent=1 // pred_region
      _
    $region13: #{tpu_custom_call.1} parent=1 // pred_fallthru
      _
    // Predicated region
    $region14: #{tpu_custom_call.1} parent=1 // pred_check
      _
    $region15: #{tpu_custom_call.1} parent=1 // pred_check_branch
      %38 = sbr.rel (0) target = $region17
    $region16: #{tpu_custom_call.1} parent=1 // pred_region
      %39 = dma.done [#allocation3], 896
    $region17: #{tpu_custom_call.1} parent=1 // pred_fallthru
      _
    // Predicated region
    $region18: #{tpu_custom_call.1} parent=1 // pred_check
      _
    $region19: #{tpu_custom_call.1} parent=1 // pred_check_branch
      %41 = sbr.rel (0) target = $region21
    $region20: #{tpu_custom_call.1} parent=1 // pred_region
      %42 = dma.done [#allocation6], 6272
    $region21: #{tpu_custom_call.1} parent=1 // pred_fallthru
      _
    %v44 = vld [vmem:[#allocation2] sm:$0xff]
    %v45 = vld [vmem:[#allocation2 + $0x8] sm:$0xff]
    %v46 = vld [vmem:[#allocation2 + $0x10] sm:$0xff]
    %v47 = vld [vmem:[#allocation2 + $0x18] sm:$0xf]
    %v48 = vld [vmem:[#allocation2 + $0x1c] sm:$0xff]
    %v49 = vld [vmem:[#allocation2 + $0x24] sm:$0xff]
    %v50 = vld [vmem:[#allocation2 + $0x2c] sm:$0xff]
    %v51 = vld [vmem:[#allocation2 + $0x34] sm:$0xf]
    %v52 = vld [vmem:[#allocation5] sm:$0xf]
    %v53 = vld [vmem:[#allocation5 + $0x4] sm:$0xf]
    %v54 = vld [vmem:[#allocation5 + $0x8] sm:$0xf]
    %v55 = vld [vmem:[#allocation5 + $0xc] sm:$0xf]
    %v56 = vld [vmem:[#allocation5 + $0x10] sm:$0xf]
    %v57 = vld [vmem:[#allocation5 + $0x14] sm:$0xf]
    %v58 = vld [vmem:[#allocation5 + $0x18] sm:$0xf]
    %v59 = vld [vmem:[#allocation5 + $0x1c] sm:$0xf]
    %v60 = vld [vmem:[#allocation5 + $0x20] sm:$0xf]
    %v61 = vld [vmem:[#allocation5 + $0x24] sm:$0xf]
    %v62 = vld [vmem:[#allocation5 + $0x28] sm:$0xf]
    %v63 = vld [vmem:[#allocation5 + $0x2c] sm:$0xf]
    %v64 = vld [vmem:[#allocation5 + $0x30] sm:$0xf]
    %v65 = vld [vmem:[#allocation5 + $0x34] sm:$0xf]
    %v66 = vld [vmem:[#allocation5 + $0x38] sm:$0xf]
    %v67 = vld [vmem:[#allocation5 + $0x3c] sm:$0xf]
    %v68 = vld [vmem:[#allocation5 + $0x40] sm:$0xf]
    %v69 = vld [vmem:[#allocation5 + $0x44] sm:$0xf]
    %v70 = vld [vmem:[#allocation5 + $0x48] sm:$0xf]
    %v71 = vld [vmem:[#allocation5 + $0x4c] sm:$0xf]
    %v72 = vld [vmem:[#allocation5 + $0x50] sm:$0xf]
    %v73 = vld [vmem:[#allocation5 + $0x54] sm:$0xf]
    %v74 = vld [vmem:[#allocation5 + $0x58] sm:$0xf]
    %v75 = vld [vmem:[#allocation5 + $0x5c] sm:$0xf]
    %v76 = vld [vmem:[#allocation5 + $0x60] sm:$0xf]
    %v77 = vld [vmem:[#allocation5 + $0x64] sm:$0xf]
    %v78 = vld [vmem:[#allocation5 + $0x68] sm:$0xf]
    %v79 = vld [vmem:[#allocation5 + $0x6c] sm:$0xf]
    %v80 = vld [vmem:[#allocation5 + $0x70] sm:$0xf]
    %v81 = vld [vmem:[#allocation5 + $0x74] sm:$0xf]
    %v82 = vld [vmem:[#allocation5 + $0x78] sm:$0xf]
    %v83 = vld [vmem:[#allocation5 + $0x7c] sm:$0xf]
    %v84 = vld [vmem:[#allocation5 + $0x80] sm:$0xf]
    %v85 = vld [vmem:[#allocation5 + $0x84] sm:$0xf]
    %v86 = vld [vmem:[#allocation5 + $0x88] sm:$0xf]
    %v87 = vld [vmem:[#allocation5 + $0x8c] sm:$0xf]
    %v88 = vld [vmem:[#allocation5 + $0x90] sm:$0xf]
    %v89 = vld [vmem:[#allocation5 + $0x94] sm:$0xf]
    %v90 = vld [vmem:[#allocation5 + $0x98] sm:$0xf]
    %v91 = vld [vmem:[#allocation5 + $0x9c] sm:$0xf]
    %v92 = vld [vmem:[#allocation5 + $0xa0] sm:$0xf]
    %v93 = vld [vmem:[#allocation5 + $0xa4] sm:$0xf]
    %v94 = vld [vmem:[#allocation5 + $0xa8] sm:$0xf]
    %v95 = vld [vmem:[#allocation5 + $0xac] sm:$0xf]
    %v96 = vld [vmem:[#allocation5 + $0xb0] sm:$0xf]
    %v97 = vld [vmem:[#allocation5 + $0xb4] sm:$0xf]
    %v98 = vld [vmem:[#allocation5 + $0xb8] sm:$0xf]
    %v99 = vld [vmem:[#allocation5 + $0xbc] sm:$0xf]
    %v100 = vld [vmem:[#allocation5 + $0xc0] sm:$0xf]
    %v101 = vld [vmem:[#allocation5 + $0xc4] sm:$0xf]
    %v102 = vld [vmem:[#allocation5 + $0xc8] sm:$0xf]
    %v103 = vld [vmem:[#allocation5 + $0xcc] sm:$0xf]
    %v104 = vld [vmem:[#allocation5 + $0xd0] sm:$0xf]
    %v105 = vld [vmem:[#allocation5 + $0xd4] sm:$0xf]
    %v106 = vld [vmem:[#allocation5 + $0xd8] sm:$0xf]
    %v107 = vld [vmem:[#allocation5 + $0xdc] sm:$0xf]
    %v108 = vld [vmem:[#allocation5 + $0xe0] sm:$0xf]
    %v109 = vld [vmem:[#allocation5 + $0xe4] sm:$0xf]
    %v110 = vld [vmem:[#allocation5 + $0xe8] sm:$0xf]
    %v111 = vld [vmem:[#allocation5 + $0xec] sm:$0xf]
    %v112 = vld [vmem:[#allocation5 + $0xf0] sm:$0xf]
    %v113 = vld [vmem:[#allocation5 + $0xf4] sm:$0xf]
    %v114 = vld [vmem:[#allocation5 + $0xf8] sm:$0xf]
    %v115 = vld [vmem:[#allocation5 + $0xfc] sm:$0xf]
    %v116 = vld [vmem:[#allocation5 + $0x100] sm:$0xf]
    %v117 = vld [vmem:[#allocation5 + $0x104] sm:$0xf]
    %v118 = vld [vmem:[#allocation5 + $0x108] sm:$0xf]
    %v119 = vld [vmem:[#allocation5 + $0x10c] sm:$0xf]
    %v120 = vld [vmem:[#allocation5 + $0x110] sm:$0xf]
    %v121 = vld [vmem:[#allocation5 + $0x114] sm:$0xf]
    %v122 = vld [vmem:[#allocation5 + $0x118] sm:$0xf]
    %v123 = vld [vmem:[#allocation5 + $0x11c] sm:$0xf]
    %v124 = vld [vmem:[#allocation5 + $0x120] sm:$0xf]
    %v125 = vld [vmem:[#allocation5 + $0x124] sm:$0xf]
    %v126 = vld [vmem:[#allocation5 + $0x128] sm:$0xf]
    %v127 = vld [vmem:[#allocation5 + $0x12c] sm:$0xf]
    %v128 = vld [vmem:[#allocation5 + $0x130] sm:$0xf]
    %v129 = vld [vmem:[#allocation5 + $0x134] sm:$0xf]
    %v130 = vld [vmem:[#allocation5 + $0x138] sm:$0xf]
    %v131 = vld [vmem:[#allocation5 + $0x13c] sm:$0xf]
    %v132 = vld [vmem:[#allocation5 + $0x140] sm:$0xf]
    %v133 = vld [vmem:[#allocation5 + $0x144] sm:$0xf]
    %v134 = vld [vmem:[#allocation5 + $0x148] sm:$0xf]
    %v135 = vld [vmem:[#allocation5 + $0x14c] sm:$0xf]
    %v136 = vld [vmem:[#allocation5 + $0x150] sm:$0xf]
    %v137 = vld [vmem:[#allocation5 + $0x154] sm:$0xf]
    %v138 = vld [vmem:[#allocation5 + $0x158] sm:$0xf]
    %v139 = vld [vmem:[#allocation5 + $0x15c] sm:$0xf]
    %v140 = vld [vmem:[#allocation5 + $0x160] sm:$0xf]
    %v141 = vld [vmem:[#allocation5 + $0x164] sm:$0xf]
    %v142 = vld [vmem:[#allocation5 + $0x168] sm:$0xf]
    %v143 = vld [vmem:[#allocation5 + $0x16c] sm:$0xf]
    %v144 = vld [vmem:[#allocation5 + $0x170] sm:$0xf]
    %v145 = vld [vmem:[#allocation5 + $0x174] sm:$0xf]
    %v146 = vld [vmem:[#allocation5 + $0x178] sm:$0xf]
    %v147 = vld [vmem:[#allocation5 + $0x17c] sm:$0xf]
    %v148 = vld [vmem:[#allocation5 + $0x180] sm:$0xf]
    %v149 = vld [vmem:[#allocation5 + $0x184] sm:$0xf]
    %v150 = vld [vmem:[%s2] sm:$0x1]
    %v152 = vlaneseq
    %v153 = vshrl.u32 %v152, 7
    %v154 = vsub.s32 0, %v153
    %v155 = vrot.slane %v150, %v154
    %v165 = vunpack.c.l.b16 %v44
    %v166 = vunpack.c.h.b16 %v44
    %v167 = vunpack.c.l.b16 %v45
    %v168 = vunpack.c.h.b16 %v45
    %v169 = vunpack.c.l.b16 %v46
    %v170 = vunpack.c.h.b16 %v46
    %v171 = vunpack.c.l.b16 %v47
    %v172 = vunpack.c.l.b16 %v48
    %v173 = vunpack.c.h.b16 %v48
    %v174 = vunpack.c.l.b16 %v49
    %v175 = vunpack.c.h.b16 %v49
    %v176 = vunpack.c.l.b16 %v50
    %v177 = vunpack.c.h.b16 %v50
    %v178 = vunpack.c.l.b16 %v51
    %v179 = vpack.c.b16 %v172, %v165
    %v180 = vpack.c.b16 %v173, %v166
    %v181 = vpack.c.b16 %v174, %v167
    %v182 = vpack.c.b16 %v175, %v168
    %v183 = vpack.c.b16 %v176, %v169
    %v184 = vpack.c.b16 %v177, %v170
    %v185 = vpack.c.b16 %v178, %v171
    %v290 = vunpack.c.l.b16 %v52
    %v291 = vunpack.c.l.b16 %v53
    %v292 = vunpack.c.l.b16 %v54
    %v293 = vunpack.c.l.b16 %v55
    %v294 = vunpack.c.l.b16 %v56
    %v295 = vunpack.c.l.b16 %v57
    %v296 = vunpack.c.l.b16 %v58
    %v297 = vunpack.c.l.b16 %v59
    %v298 = vunpack.c.l.b16 %v60
    %v299 = vunpack.c.l.b16 %v61
    %v300 = vunpack.c.l.b16 %v62
    %v301 = vunpack.c.l.b16 %v63
    %v302 = vunpack.c.l.b16 %v64
    %v303 = vunpack.c.l.b16 %v65
    %v304 = vunpack.c.l.b16 %v66
    %v305 = vunpack.c.l.b16 %v67
    %v306 = vunpack.c.l.b16 %v68
    %v307 = vunpack.c.l.b16 %v69
    %v308 = vunpack.c.l.b16 %v70
    %v309 = vunpack.c.l.b16 %v71
    %v310 = vunpack.c.l.b16 %v72
    %v311 = vunpack.c.l.b16 %v73
    %v312 = vunpack.c.l.b16 %v74
    %v313 = vunpack.c.l.b16 %v75
    %v314 = vunpack.c.l.b16 %v76
    %v315 = vunpack.c.l.b16 %v77
    %v316 = vunpack.c.l.b16 %v78
    %v317 = vunpack.c.l.b16 %v79
    %v318 = vunpack.c.l.b16 %v80
    %v319 = vunpack.c.l.b16 %v81
    %v320 = vunpack.c.l.b16 %v82
    %v321 = vunpack.c.l.b16 %v83
    %v322 = vunpack.c.l.b16 %v84
    %v323 = vunpack.c.l.b16 %v85
    %v324 = vunpack.c.l.b16 %v86
    %v325 = vunpack.c.l.b16 %v87
    %v326 = vunpack.c.l.b16 %v88
    %v327 = vunpack.c.l.b16 %v89
    %v328 = vunpack.c.l.b16 %v90
    %v329 = vunpack.c.l.b16 %v91
    %v330 = vunpack.c.l.b16 %v92
    %v331 = vunpack.c.l.b16 %v93
    %v332 = vunpack.c.l.b16 %v94
    %v333 = vunpack.c.l.b16 %v95
    %v334 = vunpack.c.l.b16 %v96
    %v335 = vunpack.c.l.b16 %v97
    %v336 = vunpack.c.l.b16 %v98
    %v337 = vunpack.c.l.b16 %v99
    %v338 = vunpack.c.l.b16 %v100
    %v339 = vunpack.c.l.b16 %v101
    %v340 = vunpack.c.l.b16 %v102
    %v341 = vunpack.c.l.b16 %v103
    %v342 = vunpack.c.l.b16 %v104
    %v343 = vunpack.c.l.b16 %v105
    %v344 = vunpack.c.l.b16 %v106
    %v345 = vunpack.c.l.b16 %v107
    %v346 = vunpack.c.l.b16 %v108
    %v347 = vunpack.c.l.b16 %v109
    %v348 = vunpack.c.l.b16 %v110
    %v349 = vunpack.c.l.b16 %v111
    %v350 = vunpack.c.l.b16 %v112
    %v351 = vunpack.c.l.b16 %v113
    %v352 = vunpack.c.l.b16 %v114
    %v353 = vunpack.c.l.b16 %v115
    %v354 = vunpack.c.l.b16 %v116
    %v355 = vunpack.c.l.b16 %v117
    %v356 = vunpack.c.l.b16 %v118
    %v357 = vunpack.c.l.b16 %v119
    %v358 = vunpack.c.l.b16 %v120
    %v359 = vunpack.c.l.b16 %v121
    %v360 = vunpack.c.l.b16 %v122
    %v361 = vunpack.c.l.b16 %v123
    %v362 = vunpack.c.l.b16 %v124
    %v363 = vunpack.c.l.b16 %v125
    %v364 = vunpack.c.l.b16 %v126
    %v365 = vunpack.c.l.b16 %v127
    %v366 = vunpack.c.l.b16 %v128
    %v367 = vunpack.c.l.b16 %v129
    %v368 = vunpack.c.l.b16 %v130
    %v369 = vunpack.c.l.b16 %v131
    %v370 = vunpack.c.l.b16 %v132
    %v371 = vunpack.c.l.b16 %v133
    %v372 = vunpack.c.l.b16 %v134
    %v373 = vunpack.c.l.b16 %v135
    %v374 = vunpack.c.l.b16 %v136
    %v375 = vunpack.c.l.b16 %v137
    %v376 = vunpack.c.l.b16 %v138
    %v377 = vunpack.c.l.b16 %v139
    %v378 = vunpack.c.l.b16 %v140
    %v379 = vunpack.c.l.b16 %v141
    %v380 = vunpack.c.l.b16 %v142
    %v381 = vunpack.c.l.b16 %v143
    %v382 = vunpack.c.l.b16 %v144
    %v383 = vunpack.c.l.b16 %v145
    %v384 = vunpack.c.l.b16 %v146
    %v385 = vunpack.c.l.b16 %v147
    %v386 = vunpack.c.l.b16 %v148
    %v387 = vunpack.c.l.b16 %v149
    %v388 = vpack.c.b16 %v291, %v290
    %v389 = vpack.c.b16 %v293, %v292
    %v390 = vpack.c.b16 %v295, %v294
    %v391 = vpack.c.b16 %v297, %v296
    %v392 = vpack.c.b16 %v299, %v298
    %v393 = vpack.c.b16 %v301, %v300
    %v394 = vpack.c.b16 %v303, %v302
    %v395 = vpack.c.b16 %v305, %v304
    %v396 = vpack.c.b16 %v307, %v306
    %v397 = vpack.c.b16 %v309, %v308
    %v398 = vpack.c.b16 %v311, %v310
    %v399 = vpack.c.b16 %v313, %v312
    %v400 = vpack.c.b16 %v315, %v314
    %v401 = vpack.c.b16 %v317, %v316
    %v402 = vpack.c.b16 %v319, %v318
    %v403 = vpack.c.b16 %v321, %v320
    %v404 = vpack.c.b16 %v323, %v322
    %v405 = vpack.c.b16 %v325, %v324
    %v406 = vpack.c.b16 %v327, %v326
    %v407 = vpack.c.b16 %v329, %v328
    %v408 = vpack.c.b16 %v331, %v330
    %v409 = vpack.c.b16 %v333, %v332
    %v410 = vpack.c.b16 %v335, %v334
    %v411 = vpack.c.b16 %v337, %v336
    %v412 = vpack.c.b16 %v339, %v338
    %v413 = vpack.c.b16 %v341, %v340
    %v414 = vpack.c.b16 %v343, %v342
    %v415 = vpack.c.b16 %v345, %v344
    %v416 = vpack.c.b16 %v347, %v346
    %v417 = vpack.c.b16 %v349, %v348
    %v418 = vpack.c.b16 %v351, %v350
    %v419 = vpack.c.b16 %v353, %v352
    %v420 = vpack.c.b16 %v355, %v354
    %v421 = vpack.c.b16 %v357, %v356
    %v422 = vpack.c.b16 %v359, %v358
    %v423 = vpack.c.b16 %v361, %v360
    %v424 = vpack.c.b16 %v363, %v362
    %v425 = vpack.c.b16 %v365, %v364
    %v426 = vpack.c.b16 %v367, %v366
    %v427 = vpack.c.b16 %v369, %v368
    %v428 = vpack.c.b16 %v371, %v370
    %v429 = vpack.c.b16 %v373, %v372
    %v430 = vpack.c.b16 %v375, %v374
    %v431 = vpack.c.b16 %v377, %v376
    %v432 = vpack.c.b16 %v379, %v378
    %v433 = vpack.c.b16 %v381, %v380
    %v434 = vpack.c.b16 %v383, %v382
    %v435 = vpack.c.b16 %v385, %v384
    %v436 = vpack.c.b16 %v387, %v386
    %vm486 = vcmask 130048
    %v488 = vsel %vm486, %v185, 0
    %490 = vmatprep.subr.bf16.mxu0 0
    %491 = vmatpush1.bf16.msra.mxu0 %v388
    %492 = vmatprep.subr.bf16.mxu0 0
    %493 = vmatpush1.bf16.msra.mxu0 %v389
    %494 = vmatprep.subr.bf16.mxu0 0
    %495 = vmatpush1.bf16.msra.mxu0 %v390
    %496 = vmatprep.subr.bf16.mxu0 0
    %497 = vmatpush1.bf16.msra.mxu0 %v391
    %498 = vmatprep.subr.bf16.mxu0 0
    %499 = vmatpush1.bf16.msra.mxu0 %v392
    %500 = vmatprep.subr.bf16.mxu0 0
    %501 = vmatpush1.bf16.msra.mxu0 %v393
    %502 = vmatprep.subr.bf16.mxu0 0
    %503 = vmatpush1.bf16.msra.mxu0 %v394
    %504 = vmatprep.subr.bf16.mxu0 0
    %505 = vmatpush1.bf16.msra.mxu0 %v395
    %506 = vmatprep.subr.bf16.mxu0 0
    %507 = vmatpush1.bf16.msra.mxu0 %v396
    %508 = vmatprep.subr.bf16.mxu0 0
    %509 = vmatpush1.bf16.msra.mxu0 %v397
    %510 = vmatprep.subr.bf16.mxu0 0
    %511 = vmatpush1.bf16.msra.mxu0 %v398
    %512 = vmatprep.subr.bf16.mxu0 0
    %513 = vmatpush1.bf16.msra.mxu0 %v399
    %514 = vmatprep.subr.bf16.mxu0 0
    %515 = vmatpush1.bf16.msra.mxu0 %v400
    %516 = vmatprep.subr.bf16.mxu0 0
    %517 = vmatpush1.bf16.msra.mxu0 %v401
    %518 = vmatprep.subr.bf16.mxu0 0
    %519 = vmatpush1.bf16.msra.mxu0 %v402
    %520 = vmatprep.subr.bf16.mxu0 0
    %521 = vmatpush1.bf16.msra.mxu0 %v403
    %522 = vmatprep.mubr.bf16.mxu0 %v180
    %523 = vmatmul.mubr.bf16.gmra.mrb[0].mxu0 %v179
    %v524 = vpop.f32.mrb[0].mxu0
    %v525 = vadd.f32 %v155, %v524
    %v526 = vpop.f32.mrb[0].mxu0
    %v527 = vpop.f32.mrb[0].mxu0
    %v528 = vadd.f32 %v155, %v527
    %v529 = vpop.f32.mrb[0].mxu0
    %530 = vdwg.mxu0
    %531 = vmatprep.subr.bf16.mxu0 0
    %532 = vmatpush1.bf16.msra.mxu0 %v404
    %533 = vmatprep.subr.bf16.mxu0 0
    %534 = vmatpush1.bf16.msra.mxu0 %v405
    %535 = vmatprep.subr.bf16.mxu0 0
    %536 = vmatpush1.bf16.msra.mxu0 %v406
    %537 = vmatprep.subr.bf16.mxu0 0
    %538 = vmatpush1.bf16.msra.mxu0 %v407
    %539 = vmatprep.subr.bf16.mxu0 0
    %540 = vmatpush1.bf16.msra.mxu0 %v408
    %541 = vmatprep.subr.bf16.mxu0 0
    %542 = vmatpush1.bf16.msra.mxu0 %v409
    %543 = vmatprep.subr.bf16.mxu0 0
    %544 = vmatpush1.bf16.msra.mxu0 %v410
    %545 = vmatprep.subr.bf16.mxu0 0
    %546 = vmatpush1.bf16.msra.mxu0 %v411
    %547 = vmatprep.subr.bf16.mxu0 0
    %548 = vmatpush1.bf16.msra.mxu0 %v412
    %549 = vmatprep.subr.bf16.mxu0 0
    %550 = vmatpush1.bf16.msra.mxu0 %v413
    %551 = vmatprep.subr.bf16.mxu0 0
    %552 = vmatpush1.bf16.msra.mxu0 %v414
    %553 = vmatprep.subr.bf16.mxu0 0
    %554 = vmatpush1.bf16.msra.mxu0 %v415
    %555 = vmatprep.subr.bf16.mxu0 0
    %556 = vmatpush1.bf16.msra.mxu0 %v416
    %557 = vmatprep.subr.bf16.mxu0 0
    %558 = vmatpush1.bf16.msra.mxu0 %v417
    %559 = vmatprep.subr.bf16.mxu0 0
    %560 = vmatpush1.bf16.msra.mxu0 %v418
    %561 = vmatprep.subr.bf16.mxu0 0
    %562 = vmatpush1.bf16.msra.mxu0 %v419
    %563 = vmatprep.mubr.bf16.mxu0 %v182
    %564 = vmatmul.mubr.bf16.gmra.mrb[0].mxu0 %v181
    %v565 = vpop.f32.mrb[0].mxu0
    %v566 = vadd.f32 %v525, %v565
    %v567 = vpop.f32.mrb[0].mxu0
    %v568 = vpop.f32.mrb[0].mxu0
    %v569 = vadd.f32 %v528, %v568
    %v570 = vpop.f32.mrb[0].mxu0
    %571 = vdwg.mxu0
    %572 = vmatprep.subr.bf16.mxu0 0
    %573 = vmatpush1.bf16.msra.mxu0 %v420
    %574 = vmatprep.subr.bf16.mxu0 0
    %575 = vmatpush1.bf16.msra.mxu0 %v421
    %576 = vmatprep.subr.bf16.mxu0 0
    %577 = vmatpush1.bf16.msra.mxu0 %v422
    %578 = vmatprep.subr.bf16.mxu0 0
    %579 = vmatpush1.bf16.msra.mxu0 %v423
    %580 = vmatprep.subr.bf16.mxu0 0
    %581 = vmatpush1.bf16.msra.mxu0 %v424
    %582 = vmatprep.subr.bf16.mxu0 0
    %583 = vmatpush1.bf16.msra.mxu0 %v425
    %584 = vmatprep.subr.bf16.mxu0 0
    %585 = vmatpush1.bf16.msra.mxu0 %v426
    %586 = vmatprep.subr.bf16.mxu0 0
    %587 = vmatpush1.bf16.msra.mxu0 %v427
    %588 = vmatprep.subr.bf16.mxu0 0
    %589 = vmatpush1.bf16.msra.mxu0 %v428
    %590 = vmatprep.subr.bf16.mxu0 0
    %591 = vmatpush1.bf16.msra.mxu0 %v429
    %592 = vmatprep.subr.bf16.mxu0 0
    %593 = vmatpush1.bf16.msra.mxu0 %v430
    %594 = vmatprep.subr.bf16.mxu0 0
    %595 = vmatpush1.bf16.msra.mxu0 %v431
    %596 = vmatprep.subr.bf16.mxu0 0
    %597 = vmatpush1.bf16.msra.mxu0 %v432
    %598 = vmatprep.subr.bf16.mxu0 0
    %599 = vmatpush1.bf16.msra.mxu0 %v433
    %600 = vmatprep.subr.bf16.mxu0 0
    %601 = vmatpush1.bf16.msra.mxu0 %v434
    %602 = vmatprep.subr.bf16.mxu0 0
    %603 = vmatpush1.bf16.msra.mxu0 %v435
    %604 = vmatprep.mubr.bf16.mxu0 %v184
    %605 = vmatmul.mubr.bf16.gmra.mrb[0].mxu0 %v183
    %v606 = vpop.f32.mrb[0].mxu0
    %v607 = vadd.f32 %v566, %v606
    %v608 = vpop.f32.mrb[0].mxu0
    %v609 = vpop.f32.mrb[0].mxu0
    %v610 = vadd.f32 %v569, %v609
    %v611 = vpop.f32.mrb[0].mxu0
    %612 = vdwg.mxu0
    %613 = vmatprep.subr.bf16.mxu0 0
    %614 = vmatpush1.bf16.msra.mxu0 %v436
    %615 = vmatprep.subr.bf16.mxu0 0
    %616 = vmatpush1.bf16.msra.mxu0 0
    %617 = vmatprep.subr.bf16.mxu0 0
    %618 = vmatpush1.bf16.msra.mxu0 0
    %619 = vmatprep.subr.bf16.mxu0 0
    %620 = vmatpush1.bf16.msra.mxu0 0
    %621 = vmatprep.subr.bf16.mxu0 0
    %622 = vmatpush1.bf16.msra.mxu0 0
    %623 = vmatprep.subr.bf16.mxu0 0
    %624 = vmatpush1.bf16.msra.mxu0 0
    %625 = vmatprep.subr.bf16.mxu0 0
    %626 = vmatpush1.bf16.msra.mxu0 0
    %627 = vmatprep.subr.bf16.mxu0 0
    %628 = vmatpush1.bf16.msra.mxu0 0
    %629 = vmatprep.subr.bf16.mxu0 0
    %630 = vmatpush1.bf16.msra.mxu0 0
    %631 = vmatprep.subr.bf16.mxu0 0
    %632 = vmatpush1.bf16.msra.mxu0 0
    %633 = vmatprep.subr.bf16.mxu0 0
    %634 = vmatpush1.bf16.msra.mxu0 0
    %635 = vmatprep.subr.bf16.mxu0 0
    %636 = vmatpush1.bf16.msra.mxu0 0
    %637 = vmatprep.subr.bf16.mxu0 0
    %638 = vmatpush1.bf16.msra.mxu0 0
    %639 = vmatprep.subr.bf16.mxu0 0
    %640 = vmatpush1.bf16.msra.mxu0 0
    %641 = vmatprep.subr.bf16.mxu0 0
    %642 = vmatpush1.bf16.msra.mxu0 0
    %643 = vmatprep.subr.bf16.mxu0 0
    %644 = vmatpush1.bf16.msra.mxu0 0
    %645 = vmatprep.mubr.bf16.mxu0 0
    %646 = vmatmul.mubr.bf16.gmra.mrb[0].mxu0 %v488
    %v647 = vpop.f32.mrb[0].mxu0
    %v648 = vadd.f32 %v607, %v647
    %v649 = vpop.f32.mrb[0].mxu0
    %v650 = vpop.f32.mrb[0].mxu0
    %v651 = vadd.f32 %v610, %v650
    %v652 = vpop.f32.mrb[0].mxu0
    %653 = vdwg.mxu0
    %654 = vst [vmem:[#allocation7] sm:$0xff] %v648
    %655 = vst [vmem:[#allocation7 + $0x8] sm:$0xff] %v651
    // Predicated region
    $region22: #{tpu_custom_call.1} parent=1 // pred_check
      _
    $region23: #{tpu_custom_call.1} parent=1 // pred_check_branch
      %657 = sbr.rel (0) target = $region25
    $region24: #{tpu_custom_call.1} parent=1 // pred_region
      %s659 = ssub.s32 256, 256
      %660 = vsyncadd [#allocation4], %s659
      %s661 = sshll.u32 [#allocation7], 4
      %s662 = int_to_ptr.vmem [resolvable:$true] %s661
      %667 = dma.vmem_to_hbm [thread:$0]  %s662, 256, %s3, [#allocation4], 128, 128, 8
    $region25: #{tpu_custom_call.1} parent=1 // pred_fallthru
      _
    // Predicated region
    $region26: #{tpu_custom_call.1} parent=1 // pred_check
      _
    $region27: #{tpu_custom_call.1} parent=1 // pred_check_branch
      %669 = sbr.rel (0) target = $region29
    $region28: #{tpu_custom_call.1} parent=1 // pred_region
      %670 = dma.done [#allocation4], 256
    $region29: #{tpu_custom_call.1} parent=1 // pred_fallthru
      _
    %671 = vsyncpa [#allocation3], 1
    %672 = vsyncpa [#allocation6], 1
    %673 = vsyncpa [#allocation4], 1

</llo_original>
